<compile_context>
chip_gen: v5e
topology: v5e:2x2
jax: 0.10.0
libtpu: 0.0.40
codegen_flags: <defaults>
</compile_context>

<pallas_src>
import jax
import jax.numpy as jnp
from jax import lax
from jax.experimental import pallas as pl
from jax.experimental.pallas import tpu as pltpu


# --------------------------------------------------------------------------
# Kernel
# --------------------------------------------------------------------------
def fusion_kernel(x1_ref, x2_ref, w1_ref, w2_ref, b_ref, wo_ref, bo_ref, o_ref):
    mat_dtype = w1_ref.dtype
    # In-kernel cast (VPU, hidden under the input DMA). Inputs arrive in their
    # native dtype (f32 here) so the wrapper never does an extra HBM pass.
    x1 = x1_ref[...].astype(mat_dtype)
    x2 = x2_ref[...].astype(mat_dtype)

    # Fused embeddings + fc1: z = relu(x1 @ W1' + x2 @ W2' + b')   (f32 accum)
    z = (jnp.dot(x1, w1_ref[...], preferred_element_type=jnp.float32)
         + jnp.dot(x2, w2_ref[...], preferred_element_type=jnp.float32)
         + b_ref[...])
    z = jnp.maximum(z, 0.0)

    # fc2 computed transposed so the batch dim lands on the output lane axis,
    # via a transposed contraction (no explicit z.T -> no XLU transpose):
    #   (L, tb) = w_out(L, H) . z(tb, H)   contracting H with H.
    logits = lax.dot_general(
        wo_ref[...], z.astype(wo_ref.dtype),
        dimension_numbers=(((1,), (1,)), ((), ())),
        preferred_element_type=jnp.float32) + bo_ref[...]
    o_ref[...] = jax.nn.sigmoid(logits)


# --------------------------------------------------------------------------
# Host-side parameter preparation (fold + pad H axis only + dtype)
# --------------------------------------------------------------------------
def _pad_to_multiple(a, axis, mult):
    pad = (-a.shape[axis]) % mult
    if pad == 0:
        return a
    widths = [(0, 0)] * a.ndim
    widths[axis] = (0, pad)
    return jnp.pad(a, widths)


def init_params(key, input_size, hidden_size, n_labels):
    """Module-equivalent params in (in, out) layout (i.e. torch W^T), f32."""
    ks = jax.random.split(key, 8)
    s = 0.05
    return {
        "w_e1": s * jax.random.normal(ks[0], (input_size, hidden_size), jnp.float32),
        "b_e1": s * jax.random.normal(ks[1], (1, hidden_size), jnp.float32),
        "w_e2": s * jax.random.normal(ks[2], (input_size, hidden_size), jnp.float32),
        "b_e2": s * jax.random.normal(ks[3], (1, hidden_size), jnp.float32),
        "w_f1": s * jax.random.normal(ks[4], (2 * hidden_size, hidden_size), jnp.float32),
        "b_f1": s * jax.random.normal(ks[5], (1, hidden_size), jnp.float32),
        "w_f2": s * jax.random.normal(ks[6], (hidden_size, n_labels), jnp.float32),
        "b_f2": s * jax.random.normal(ks[7], (1, n_labels), jnp.float32),
    }


def prepare_params(p, *, use_bf16=True, lane=128):
    """Fold embeddings into fc1; pad ONLY the H (lane) axis; pick matmul dtype.

    Because there is no activation between the embedding Linears and fc1:
        z_pre = x1 @ (We1 @ Wf1a) + x2 @ (We2 @ Wf1b)
                + (be1 @ Wf1a + be2 @ Wf1b + bf1)
    Zero-padding the H axis is exact: padded z columns are relu(0)=0 and meet
    zero w_out columns. The contraction dim D is intentionally left unpadded.
    """
    H = p["w_f2"].shape[0]
    w_f1a, w_f1b = p["w_f1"][:H], p["w_f1"][H:]
    w1 = p["w_e1"] @ w_f1a                                        # (D, H)
    w2 = p["w_e2"] @ w_f1b                                        # (D, H)
    b = p["b_e1"] @ w_f1a + p["b_e2"] @ w_f1b + p["b_f1"]         # (1, H)
    w_out = p["w_f2"].T                                           # (L, H)
    b_out = p["b_f2"].T                                           # (L, 1)

    w1 = _pad_to_multiple(w1, 1, lane)
    w2 = _pad_to_multiple(w2, 1, lane)
    b = _pad_to_multiple(b, 1, lane)
    w_out = _pad_to_multiple(w_out, 1, lane)

    mat_dtype = jnp.bfloat16 if use_bf16 else jnp.float32
    return {
        "w1": w1.astype(mat_dtype),
        "w2": w2.astype(mat_dtype),
        "b": b.astype(jnp.float32),          # bias/relu/sigmoid stay f32
        "w_out": w_out.astype(mat_dtype),    # fc2 also runs on the bf16 MXU path
        "b_out": b_out.astype(jnp.float32),
    }


# --------------------------------------------------------------------------
# Tiling heuristic
# --------------------------------------------------------------------------
_VMEM_BUDGET = 24 * 1024 * 1024   # conservative vs v7x's 64 MiB physical VMEM


def _choose_batch_tile(B, D, Hp, L, x_itemsize=4, w_itemsize=2):
    """Largest multiple-of-128 batch tile with >=2 grid steps that fits VMEM."""
    if B <= 128:
        return B

    def est(tb):
        return (2 * 2 * tb * D * x_itemsize          # x1, x2 (double-buffered)
                + 2 * 2 * D * Hp * w_itemsize        # w1, w2
                + 2 * (L * Hp * w_itemsize + Hp * 4 + L * 4)
                + 2 * L * tb * 4                     # output blocks
                + 3 * tb * Hp * 4)                   # z + intermediates headroom

    for tb in (1024, 512, 256, 128):
        if pl.cdiv(B, tb) >= 2 and est(tb) <= _VMEM_BUDGET:
            return tb
    return 128


def _const_spec(shape, single_buffer):
    """BlockSpec for a grid-constant operand (index_map always (0, 0, ...))."""
    index_map = lambda i: (0,) * len(shape)
    if single_buffer:
        # Never re-fetched -> second pipeline buffer is wasted VMEM (v7x).
        return pl.BlockSpec(shape, index_map, pipeline_mode=pl.Buffered(1))
    return pl.BlockSpec(shape, index_map)


# --------------------------------------------------------------------------
# Wrapper
# --------------------------------------------------------------------------
def fusion_forward(x1, x2, params, *, batch_tile=None, single_buffer_weights=False):
    assert x1.shape == x2.shape
    B, D = x1.shape
    w1, w2 = params["w1"], params["w2"]
    Dw, Hp = w1.shape
    assert D == Dw, "feature dim mismatch with prepared params"
    L = params["w_out"].shape[0]

    if batch_tile is None:
        tb = _choose_batch_tile(B, D, Hp, L, x_itemsize=x1.dtype.itemsize)
    else:
        tb = batch_tile
        assert tb == B or tb % 128 == 0, \
            "batch_tile must be a multiple of 128 (or the full batch)"

    grid = pl.cdiv(B, tb)   # ragged last block is handled by Pallas; no pad pass

    out_t = pl.pallas_call(
        fusion_kernel,
        out_shape=jax.ShapeDtypeStruct((L, B), jnp.float32),
        grid_spec=pltpu.PrefetchScalarGridSpec(
            num_scalar_prefetch=0,
            grid=(grid,),
            in_specs=[
                pl.BlockSpec((tb, D), lambda i: (i, 0)),            # x1 tile
                pl.BlockSpec((tb, D), lambda i: (i, 0)),            # x2 tile
                _const_spec((D, Hp), single_buffer_weights),        # W1'
                _const_spec((D, Hp), single_buffer_weights),        # W2'
                _const_spec((1, Hp), single_buffer_weights),        # b'
                _const_spec((L, Hp), single_buffer_weights),        # w_out (fc2^T)
                _const_spec((L, 1), single_buffer_weights),         # b_out
            ],
            out_specs=pl.BlockSpec((L, tb), lambda i: (0, i)),       # lane-dense
        ),
        compiler_params=pltpu.CompilerParams(
            dimension_semantics=("parallel",),
            vmem_limit_bytes=32 * 1024 * 1024,   # safe on v5e/v6e/v7x
        ),
    )(x1, x2, params["w1"], params["w2"], params["b"],
      params["w_out"], params["b_out"])

    # (L, B) lane-dense kernel output -> (B, L) module output.
    return out_t.T


# --------------------------------------------------------------------------
# Pure-JAX reference (unfused, exactly the PyTorch module math)
# --------------------------------------------------------------------------
def fusion_forward_ref(x1, x2, p):
    h1 = x1 @ p["w_e1"] + p["b_e1"]
    h2 = x2 @ p["w_e2"] + p["b_e2"]
    z = jnp.concatenate([h1, h2], axis=1) @ p["w_f1"] + p["b_f1"]
    z = jnp.maximum(z, 0.0)
    return jax.nn.sigmoid(z @ p["w_f2"] + p["b_f2"])


if __name__ == "__main__":
    key = jax.random.PRNGKey(0)
    k_x1, k_x2, k_p, k_y1, k_y2, k_q = jax.random.split(key, 6)

    # ---- primary check: lane-friendly shapes, >=2 batch tiles -------------
    B, INPUT_SIZE, HIDDEN_SIZE, N_LABELS = 256, 256, 128, 1
    x1 = jax.random.normal(k_x1, (B, INPUT_SIZE), jnp.float32)
    x2 = jax.random.normal(k_x2, (B, INPUT_SIZE), jnp.float32)
    params = init_params(k_p, INPUT_SIZE, HIDDEN_SIZE, N_LABELS)
    ref = fusion_forward_ref(x1, x2, params)

    # f32 matmul-operand path: tight check of the fused kernel semantics.
    p_f32 = prepare_params(params, use_bf16=False)
    out_f32 = jax.block_until_ready(fusion_forward(x1, x2, p_f32, batch_tile=128))
    assert out_f32.shape == (B, N_LABELS)
    assert jnp.allclose(out_f32, ref, atol=1e-4, rtol=1e-4)

    # bf16 matmul-operand path (default / perf path): looser tolerance
    # (documented contract: sigmoid outputs validated at atol=1e-2).
    p_bf16 = prepare_params(params, use_bf16=True)
    out_bf16 = jax.block_until_ready(fusion_forward(x1, x2, p_bf16))
    assert out_bf16.shape == (B, N_LABELS)
    assert jnp.allclose(out_bf16, ref, atol=1e-2, rtol=0.0)

    # ---- ragged / unpadded check: B not a tile multiple, D not 128-mult ---
    B2, D2, H2, L2 = 200, 192, 96, 2
    x1b = jax.random.normal(k_y1, (B2, D2), jnp.float32)
    x2b = jax.random.normal(k_y2, (B2, D2), jnp.float32)
    params2 = init_params(k_q, D2, H2, L2)
    ref2 = fusion_forward_ref(x1b, x2b, params2)
    out2 = jax.block_until_ready(
        fusion_forward(x1b, x2b, prepare_params(params2, use_bf16=False)))
    assert out2.shape == (B2, L2)
    assert jnp.allclose(out2, ref2, atol=1e-4, rtol=1e-4)

    print("KERNEL_OK")
</pallas_src>

<mosaic_0001>
module attributes {stable_mosaic.version = 11 : i64} {
  func.func @fusion_kernel(%arg0: i32, %arg1: memref<128x256xf32, #tpu.memory_space<vmem>>, %arg2: memref<128x256xf32, #tpu.memory_space<vmem>>, %arg3: memref<256x128xf32, #tpu.memory_space<vmem>>, %arg4: memref<256x128xf32, #tpu.memory_space<vmem>>, %arg5: memref<1x128xf32, #tpu.memory_space<vmem>>, %arg6: memref<1x128xf32, #tpu.memory_space<vmem>>, %arg7: memref<1x1xf32, #tpu.memory_space<vmem>>, %arg8: memref<1x128xf32, #tpu.memory_space<vmem>>) attributes {dimension_semantics = [#tpu.dimension_semantics<parallel>], iteration_bounds = array<i64: 2>, scalar_prefetch = 0 : i64, scratch_operands = 0 : i64, tpu.core_type = #tpu.core_type<tc>, window_params = [{transform_indices = @transform_0, window_bounds = array<i64: 128, 256>}, {transform_indices = @transform_1, window_bounds = array<i64: 128, 256>}, {pipeline_mode = #tpu.pipeline_mode<synchronous>, transform_indices = @transform_2, window_bounds = array<i64: 256, 128>}, {pipeline_mode = #tpu.pipeline_mode<synchronous>, transform_indices = @transform_3, window_bounds = array<i64: 256, 128>}, {pipeline_mode = #tpu.pipeline_mode<synchronous>, transform_indices = @transform_4, window_bounds = array<i64: 1, 128>}, {pipeline_mode = #tpu.pipeline_mode<synchronous>, transform_indices = @transform_5, window_bounds = array<i64: 1, 128>}, {pipeline_mode = #tpu.pipeline_mode<synchronous>, transform_indices = @transform_6, window_bounds = array<i64: 1, 1>}, {transform_indices = @transform_7, window_bounds = array<i64: 1, 128>}]} {
    %c0 = arith.constant 0 : index
    %c0_0 = arith.constant 0 : index
    %0 = vector.load %arg1[%c0, %c0_0] : memref<128x256xf32, #tpu.memory_space<vmem>>, vector<128x256xf32>
    %c0_1 = arith.constant 0 : index
    %c0_2 = arith.constant 0 : index
    %1 = vector.load %arg2[%c0_1, %c0_2] : memref<128x256xf32, #tpu.memory_space<vmem>>, vector<128x256xf32>
    %c0_3 = arith.constant 0 : index
    %c0_4 = arith.constant 0 : index
    %2 = vector.load %arg3[%c0_3, %c0_4] : memref<256x128xf32, #tpu.memory_space<vmem>>, vector<256x128xf32>
    %cst = arith.constant dense<0.000000e+00> : vector<128x128xf32>
    %3 = tpu.matmul %0, %2, %cst {dimension_numbers = #tpu.dot_dimension_numbers<[1], [0], [0], [1], [0, 0, 1, 1], [], []>} : vector<128x256xf32>, vector<256x128xf32>, vector<128x128xf32> -> vector<128x128xf32>
    %c0_5 = arith.constant 0 : index
    %c0_6 = arith.constant 0 : index
    %4 = vector.load %arg4[%c0_5, %c0_6] : memref<256x128xf32, #tpu.memory_space<vmem>>, vector<256x128xf32>
    %cst_7 = arith.constant dense<0.000000e+00> : vector<128x128xf32>
    %5 = tpu.matmul %1, %4, %cst_7 {dimension_numbers = #tpu.dot_dimension_numbers<[1], [0], [0], [1], [0, 0, 1, 1], [], []>} : vector<128x256xf32>, vector<256x128xf32>, vector<128x128xf32> -> vector<128x128xf32>
    %6 = arith.addf %3, %5 : vector<128x128xf32>
    %c0_8 = arith.constant 0 : index
    %c0_9 = arith.constant 0 : index
    %7 = vector.load %arg5[%c0_8, %c0_9] : memref<1x128xf32, #tpu.memory_space<vmem>>, vector<1x128xf32>
    %8 = vector.broadcast %7 : vector<1x128xf32> to vector<128x128xf32>
    %9 = arith.addf %6, %8 : vector<128x128xf32>
    %cst_10 = arith.constant 0.000000e+00 : f32
    %10 = vector.broadcast %cst_10 : f32 to vector<128x128xf32>
    %11 = arith.maximumf %9, %10 : vector<128x128xf32>
    %c0_11 = arith.constant 0 : index
    %c0_12 = arith.constant 0 : index
    %12 = vector.load %arg6[%c0_11, %c0_12] : memref<1x128xf32, #tpu.memory_space<vmem>>, vector<1x128xf32>
    %cst_13 = arith.constant dense<0.000000e+00> : vector<1x128xf32>
    %13 = tpu.matmul %12, %11, %cst_13 {dimension_numbers = #tpu.dot_dimension_numbers<[1], [1], [0], [0], [0, 0, 1, 0], [], []>} : vector<1x128xf32>, vector<128x128xf32>, vector<1x128xf32> -> vector<1x128xf32>
    %c0_14 = arith.constant 0 : index
    %c0_15 = arith.constant 0 : index
    %14 = vector.load %arg7[%c0_14, %c0_15] : memref<1x1xf32, #tpu.memory_space<vmem>>, vector<1x1xf32>
    %15 = vector.broadcast %14 : vector<1x1xf32> to vector<1x128xf32>
    %16 = arith.addf %13, %15 : vector<1x128xf32>
    %17 = arith.negf %16 : vector<1x128xf32>
    %18 = math.exp %17 : vector<1x128xf32>
    %cst_16 = arith.constant 1.000000e+00 : f32
    %19 = vector.broadcast %cst_16 : f32 to vector<1x128xf32>
    %20 = arith.addf %19, %18 : vector<1x128xf32>
    %21 = arith.divf %19, %20 : vector<1x128xf32>
    %c0_17 = arith.constant 0 : index
    %c0_18 = arith.constant 0 : index
    %22 = vector.load %arg8[%c0_17, %c0_18] : memref<1x128xf32, #tpu.memory_space<vmem>>, vector<1x128xf32>
    tpu.vector_store %arg8[%c0_17, %c0_18], %21 {strides = array<i32>} : memref<1x128xf32, #tpu.memory_space<vmem>>, vector<1x128xf32>,
    return
  }
  func.func @transform_0(%arg0: i32) -> (i32, i32) {
    %c0_i32 = arith.constant 0 : i32
    %c0_i32_0 = arith.constant 0 : i32
    return %arg0, %c0_i32 : i32, i32
  }
  func.func @transform_1(%arg0: i32) -> (i32, i32) {
    %c0_i32 = arith.constant 0 : i32
    %c0_i32_0 = arith.constant 0 : i32
    return %arg0, %c0_i32 : i32, i32
  }
  func.func @transform_2(%arg0: i32) -> (i32, i32) {
    %c0_i32 = arith.constant 0 : i32
    %c0_i32_0 = arith.constant 0 : i32
    %c0_i32_1 = arith.constant 0 : i32
    return %c0_i32, %c0_i32_0 : i32, i32
  }
  func.func @transform_3(%arg0: i32) -> (i32, i32) {
    %c0_i32 = arith.constant 0 : i32
    %c0_i32_0 = arith.constant 0 : i32
    %c0_i32_1 = arith.constant 0 : i32
    return %c0_i32, %c0_i32_0 : i32, i32
  }
  func.func @transform_4(%arg0: i32) -> (i32, i32) {
    %c0_i32 = arith.constant 0 : i32
    %c0_i32_0 = arith.constant 0 : i32
    %c0_i32_1 = arith.constant 0 : i32
    return %c0_i32, %c0_i32_0 : i32, i32
  }
  func.func @transform_5(%arg0: i32) -> (i32, i32) {
    %c0_i32 = arith.constant 0 : i32
    %c0_i32_0 = arith.constant 0 : i32
    %c0_i32_1 = arith.constant 0 : i32
    return %c0_i32, %c0_i32_0 : i32, i32
  }
  func.func @transform_6(%arg0: i32) -> (i32, i32) {
    %c0_i32 = arith.constant 0 : i32
    %c0_i32_0 = arith.constant 0 : i32
    %c0_i32_1 = arith.constant 0 : i32
    return %c0_i32, %c0_i32_0 : i32, i32
  }
  func.func @transform_7(%arg0: i32) -> (i32, i32) {
    %c0_i32 = arith.constant 0 : i32
    %c0_i32_0 = arith.constant 0 : i32
    return %c0_i32, %arg0 : i32, i32
  }
}

</mosaic_0001>

<llo_original>
// kernel: tpu_custom_call.1
$region0: #{tpu_custom_call.1}
  #allocation0 [shape = 'u32[]', space=smem, size = 0x4, offset = 0x4, fixed_abs, tag = 'smem constant byte address 0x4 - core index']
  #allocation1 [shape = 'u32[72,128]{1,0:T(1,128)}', space=vmem, size = 0x9000, scoped, tag = 'internal scratch']
  #allocation2 [shape = 'f32[1,1]{1,0:T(1,128)S(1)}', space=vmem, size = 0x200, scoped, tag = 'scoped memory for tpu_custom_call.1']
  %s0 = inlined_call_operand.hbm [shape: f32[256,256], index: 0, kind: input, shape index: {}]
  %s1 = inlined_call_operand.hbm [shape: f32[256,256], index: 1, kind: input, shape index: {}]
  %s2 = inlined_call_operand.hbm [shape: f32[256,128], index: 2, kind: input, shape index: {}]
  %s3 = inlined_call_operand.hbm [shape: f32[256,128], index: 3, kind: input, shape index: {}]
  %s4 = inlined_call_operand.vmem [shape: f32[1,128], index: 4, kind: input, shape index: {}]
  %s5 = inlined_call_operand.vmem [shape: f32[1,128], index: 5, kind: input, shape index: {}]
  %s6 = inlined_call_operand.<no memory space> [shape: f32[1,1], index: 6, kind: input, shape index: {}]
  %s7 = inlined_call_operand.hbm [shape: f32[1,256], index: 7, kind: output, shape index: {}]
  %s8 = sld [smem:[#allocation0]]
  $region77: #{tpu_custom_call.1} parent=0
    _
  %s10 = ssub.s32 1, %s8
  %s11 = scalar_select 0, %s10, %s8
  %v12 = vstv %s6
  %13 = vst [vmem:[#allocation2] sm:$0x1] %v12
  $region1: #{tpu_custom_call.1} parent=0
    #allocation3 [shape = 'u8[262144]{0}', space=vmem, size = 0x40000, scoped, tag = 'input window, operand 0']
    #allocation4 [shape = 's32[2]{0}', space=sflag, size = 0x8, scoped, tag = 'scoped memory for tpu_custom_call.1']
    #allocation5 [shape = 's32[2]{0}', space=sflag, size = 0x8, scoped, tag = 'scoped memory for tpu_custom_call.1']
    #allocation6 [shape = 'u8[262144]{0}', space=vmem, size = 0x40000, scoped, tag = 'input window, operand 1']
    #allocation7 [shape = 's32[2]{0}', space=sflag, size = 0x8, scoped, tag = 'scoped memory for tpu_custom_call.1']
    #allocation8 [shape = 'u8[131072]{0}', space=vmem, size = 0x20000, scoped, tag = 'input window, operand 2, single buffered']
    #allocation9 [shape = 'u8[131072]{0}', space=vmem, size = 0x20000, scoped, tag = 'input window, operand 3, single buffered']
    #allocation10 [shape = 's32[1]{0}', space=sflag, size = 0x4, scoped, tag = 'scoped memory for tpu_custom_call.1']
    #allocation11 [shape = 'u8[1024]{0}', space=vmem, size = 0x400, scoped, tag = 'output window, operand 0']
    %14 = vsyncpa [#allocation4], 0
    %s15 = scalar_lea.sflag [#allocation4], 1
    %16 = vsyncpa %s15, 0
    %17 = vsyncpa [#allocation7], 0
    %s18 = scalar_lea.sflag [#allocation7], 1
    %19 = vsyncpa %s18, 0
    %20 = vsyncpa [#allocation10], 0
    %21 = vsyncpa [#allocation5], 0
    %s22 = scalar_lea.sflag [#allocation5], 1
    %23 = vsyncpa %s22, 0
    loop: start=0, step=1, limit=4
    $region2: #{tpu_custom_call.1} parent=1 // loop_pre_header
      _
    $region3: #{tpu_custom_call.1} parent=1 // loop_header
      %s25 = sphi 0, %s29
      %p26 = scmp.ge.s32.totalorder %s25, 4
      %s35 = sphi 0, %s37
      %s38 = sphi 0, %s35
      %s39 = sphi 0, %s38
      %s55 = sphi 0, %s39
      %s61 = sphi 0, %s63
      %s64 = sphi 0, %s61
      %s65 = sphi 0, %s64
      %s81 = sphi 0, %s65
      %s85 = sphi 0, %s85
      %s87 = sphi 0, %s85
      %s88 = sphi 0, %s87
      %s102 = sphi 0, %s88
      %s106 = sphi 0, %s106
      %s108 = sphi 0, %s106
      %s109 = sphi 0, %s108
      %s123 = sphi 0, %s109
      %s127 = sphi 0, %s127
      %s129 = sphi 0, %s127
      %s130 = sphi 0, %s129
      %s144 = sphi 0, %s130
      %s148 = sphi 0, %s148
      %s150 = sphi 0, %s148
      %s151 = sphi 0, %s150
      %s165 = sphi 0, %s151
      %s169 = sphi 0, %s169
      %s171 = sphi 0, %s169
      %s172 = sphi 0, %s171
      %s186 = sphi 0, %s172
      %s192 = sphi 0, %s194
      %s195 = sphi 0, %s192
      %s196 = sphi 0, %s195
      %s212 = sphi 0, %s196
    $region4: #{tpu_custom_call.1} parent=1 // loop_header_branch
      %28 = sbr.rel (%p26) target = $region8
    $region5: #{tpu_custom_call.1} parent=1 // loop_body
      %s30 = ssub.s32 %s25, 1
      %s31 = ssub.s32 %s25, 2
      %s32 = sadd.s32 %s25, 1
      %s33 = ssub.s32 %s25, %s32
      %p34 = scmp.eq.s32.totalorder %s33, 0
      %s36 = sadd.s32 %s35, 1
      %s37 = scalar_select %p34, %s35, %s36
      %p40 = pneg %p34
      %p41 = scmp.eq.s32.totalorder %s25, 1
      %p42 = por %p40, %p41
      %p43 = scmp.ne.s32.totalorder %s35, %s38
      %p44 = scmp.eq.s32.totalorder %s25, 0
      %p45 = por %p43, %p44
      %p46 = scmp.ne.s32.totalorder %s35, %s38
      %p47 = scmp.eq.s32.totalorder %s30, 1
      %p48 = por %p46, %p47
      %p49 = scmp.ne.s32.totalorder %s38, %s39
      %p50 = scmp.eq.s32.totalorder %s30, 0
      %p51 = por %p49, %p50
      %p52 = scmp.ne.s32.totalorder %s38, %s39
      %p53 = scmp.eq.s32.totalorder %s31, 1
      %p54 = por %p52, %p53
      %p56 = scmp.ne.s32.totalorder %s39, %s55
      %p57 = scmp.eq.s32.totalorder %s31, 0
      %p58 = por %p56, %p57
      %s59 = ssub.s32 %s25, %s32
      %p60 = scmp.eq.s32.totalorder %s59, 0
      %s62 = sadd.s32 %s61, 1
      %s63 = scalar_select %p60, %s61, %s62
      %p66 = pneg %p60
      %p67 = scmp.eq.s32.totalorder %s25, 1
      %p68 = por %p66, %p67
      %p69 = scmp.ne.s32.totalorder %s61, %s64
      %p70 = scmp.eq.s32.totalorder %s25, 0
      %p71 = por %p69, %p70
      %p72 = scmp.ne.s32.totalorder %s61, %s64
      %p73 = scmp.eq.s32.totalorder %s30, 1
      %p74 = por %p72, %p73
      %p75 = scmp.ne.s32.totalorder %s64, %s65
      %p76 = scmp.eq.s32.totalorder %s30, 0
      %p77 = por %p75, %p76
      %p78 = scmp.ne.s32.totalorder %s64, %s65
      %p79 = scmp.eq.s32.totalorder %s31, 1
      %p80 = por %p78, %p79
      %p82 = scmp.ne.s32.totalorder %s65, %s81
      %p83 = scmp.eq.s32.totalorder %s31, 0
      %p84 = por %p82, %p83
      %s86 = sadd.s32 %s85, 1
      %p89 = scmp.eq.s32.totalorder %s25, 1
      %p90 = scmp.ne.s32.totalorder %s85, %s87
      %p91 = scmp.eq.s32.totalorder %s25, 0
      %p92 = por %p90, %p91
      %p93 = scmp.ne.s32.totalorder %s85, %s87
      %p94 = scmp.eq.s32.totalorder %s30, 1
      %p95 = por %p93, %p94
      %p96 = scmp.ne.s32.totalorder %s87, %s88
      %p97 = scmp.eq.s32.totalorder %s30, 0
      %p98 = por %p96, %p97
      %p99 = scmp.ne.s32.totalorder %s87, %s88
      %p100 = scmp.eq.s32.totalorder %s31, 1
      %p101 = por %p99, %p100
      %p103 = scmp.ne.s32.totalorder %s88, %s102
      %p104 = scmp.eq.s32.totalorder %s31, 0
      %p105 = por %p103, %p104
      %s107 = sadd.s32 %s106, 1
      %p110 = scmp.eq.s32.totalorder %s25, 1
      %p111 = scmp.ne.s32.totalorder %s106, %s108
      %p112 = scmp.eq.s32.totalorder %s25, 0
      %p113 = por %p111, %p112
      %p114 = scmp.ne.s32.totalorder %s106, %s108
      %p115 = scmp.eq.s32.totalorder %s30, 1
      %p116 = por %p114, %p115
      %p117 = scmp.ne.s32.totalorder %s108, %s109
      %p118 = scmp.eq.s32.totalorder %s30, 0
      %p119 = por %p117, %p118
      %p120 = scmp.ne.s32.totalorder %s108, %s109
      %p121 = scmp.eq.s32.totalorder %s31, 1
      %p122 = por %p120, %p121
      %p124 = scmp.ne.s32.totalorder %s109, %s123
      %p125 = scmp.eq.s32.totalorder %s31, 0
      %p126 = por %p124, %p125
      %s128 = sadd.s32 %s127, 1
      %p131 = scmp.eq.s32.totalorder %s25, 1
      %p132 = scmp.ne.s32.totalorder %s127, %s129
      %p133 = scmp.eq.s32.totalorder %s25, 0
      %p134 = por %p132, %p133
      %p135 = scmp.ne.s32.totalorder %s127, %s129
      %p136 = scmp.eq.s32.totalorder %s30, 1
      %p137 = por %p135, %p136
      %p138 = scmp.ne.s32.totalorder %s129, %s130
      %p139 = scmp.eq.s32.totalorder %s30, 0
      %p140 = por %p138, %p139
      %p141 = scmp.ne.s32.totalorder %s129, %s130
      %p142 = scmp.eq.s32.totalorder %s31, 1
      %p143 = por %p141, %p142
      %p145 = scmp.ne.s32.totalorder %s130, %s144
      %p146 = scmp.eq.s32.totalorder %s31, 0
      %p147 = por %p145, %p146
      %s149 = sadd.s32 %s148, 1
      %p152 = scmp.eq.s32.totalorder %s25, 1
      %p153 = scmp.ne.s32.totalorder %s148, %s150
      %p154 = scmp.eq.s32.totalorder %s25, 0
      %p155 = por %p153, %p154
      %p156 = scmp.ne.s32.totalorder %s148, %s150
      %p157 = scmp.eq.s32.totalorder %s30, 1
      %p158 = por %p156, %p157
      %p159 = scmp.ne.s32.totalorder %s150, %s151
      %p160 = scmp.eq.s32.totalorder %s30, 0
      %p161 = por %p159, %p160
      %p162 = scmp.ne.s32.totalorder %s150, %s151
      %p163 = scmp.eq.s32.totalorder %s31, 1
      %p164 = por %p162, %p163
      %p166 = scmp.ne.s32.totalorder %s151, %s165
      %p167 = scmp.eq.s32.totalorder %s31, 0
      %p168 = por %p166, %p167
      %s170 = sadd.s32 %s169, 1
      %p173 = scmp.eq.s32.totalorder %s25, 1
      %p174 = scmp.ne.s32.totalorder %s169, %s171
      %p175 = scmp.eq.s32.totalorder %s25, 0
      %p176 = por %p174, %p175
      %p177 = scmp.ne.s32.totalorder %s169, %s171
      %p178 = scmp.eq.s32.totalorder %s30, 1
      %p179 = por %p177, %p178
      %p180 = scmp.ne.s32.totalorder %s171, %s172
      %p181 = scmp.eq.s32.totalorder %s30, 0
      %p182 = por %p180, %p181
      %p183 = scmp.ne.s32.totalorder %s171, %s172
      %p184 = scmp.eq.s32.totalorder %s31, 1
      %p185 = por %p183, %p184
      %p187 = scmp.ne.s32.totalorder %s172, %s186
      %p188 = scmp.eq.s32.totalorder %s31, 0
      %p189 = por %p187, %p188
      %s190 = ssub.s32 %s25, %s32
      %p191 = scmp.eq.s32.totalorder %s190, 0
      %s193 = sadd.s32 %s192, 1
      %s194 = scalar_select %p191, %s192, %s193
      %p197 = pneg %p191
      %p198 = scmp.eq.s32.totalorder %s25, 1
      %p199 = por %p197, %p198
      %p200 = scmp.ne.s32.totalorder %s192, %s195
      %p201 = scmp.eq.s32.totalorder %s25, 0
      %p202 = por %p200, %p201
      %p203 = scmp.ne.s32.totalorder %s192, %s195
      %p204 = scmp.eq.s32.totalorder %s30, 1
      %p205 = por %p203, %p204
      %p206 = scmp.ne.s32.totalorder %s195, %s196
      %p207 = scmp.eq.s32.totalorder %s30, 0
      %p208 = por %p206, %p207
      %p209 = scmp.ne.s32.totalorder %s195, %s196
      %p210 = scmp.eq.s32.totalorder %s31, 1
      %p211 = por %p209, %p210
      %p213 = scmp.ne.s32.totalorder %s196, %s212
      %p214 = scmp.eq.s32.totalorder %s31, 0
      %p215 = por %p213, %p214
      %p216 = scmp.le.s32.totalorder 1, %s25
      %p217 = scmp.lt.s32.totalorder %s25, 3
      %p218 = pnand %p216, %p217
      %p219 = pneg %p218
      // Predicated region
      $region9: #{tpu_custom_call.1} parent=5 // pred_check
        _
      $region10: #{tpu_custom_call.1} parent=5 // pred_check_branch
        %221 = sbr.rel (%p218) target = $region12
      $region11: #{tpu_custom_call.1} parent=5 // pred_region
        %s222 = ssub.s32 %s25, 1
        // Predicated region
        $region13: #{tpu_custom_call.1} parent=11 // pred_check
          %p223 = pneg %p98
        $region14: #{tpu_custom_call.1} parent=11 // pred_check_branch
          %225 = sbr.rel (%p223) target = $region16
        $region15: #{tpu_custom_call.1} parent=11 // pred_region
          %227 = vsyncadd [#allocation7], 0
          %s228 = sshll.u32 %s2, 4
          %s229 = int_to_ptr.hbm [resolvable:$true] %s228
          %s230 = sshll.u32 [#allocation8], 4
          %s231 = int_to_ptr.vmem [resolvable:$true] %s230
          %236 = dma.hbm_to_vmem [thread:$0]  %s229, 4096, %s231, [#allocation7], 128, 128, 8
        $region16: #{tpu_custom_call.1} parent=11 // pred_fallthru
          _
        // Predicated region
        $region17: #{tpu_custom_call.1} parent=11 // pred_check
          %p237 = pneg %p119
        $region18: #{tpu_custom_call.1} parent=11 // pred_check_branch
          %239 = sbr.rel (%p237) target = $region20
        $region19: #{tpu_custom_call.1} parent=11 // pred_region
          %241 = vsyncadd [#allocation10], 0
          %s242 = sshll.u32 %s3, 4
          %s243 = int_to_ptr.hbm [resolvable:$true] %s242
          %s244 = sshll.u32 [#allocation9], 4
          %s245 = int_to_ptr.vmem [resolvable:$true] %s244
          %250 = dma.hbm_to_vmem [thread:$0]  %s243, 4096, %s245, [#allocation10], 128, 128, 8
        $region20: #{tpu_custom_call.1} parent=11 // pred_fallthru
          _
        // Predicated region
        $region21: #{tpu_custom_call.1} parent=11 // pred_check
          %p251 = pneg %p140
        $region22: #{tpu_custom_call.1} parent=11 // pred_check_branch
          %253 = sbr.rel (%p251) target = $region24
        $region23: #{tpu_custom_call.1} parent=11 // pred_region
          _
        $region24: #{tpu_custom_call.1} parent=11 // pred_fallthru
          _
        // Predicated region
        $region25: #{tpu_custom_call.1} parent=11 // pred_check
          %p254 = pneg %p161
        $region26: #{tpu_custom_call.1} parent=11 // pred_check_branch
          %256 = sbr.rel (%p254) target = $region28
        $region27: #{tpu_custom_call.1} parent=11 // pred_region
          _
        $region28: #{tpu_custom_call.1} parent=11 // pred_fallthru
          _
        // Predicated region
        $region29: #{tpu_custom_call.1} parent=11 // pred_check
          %p257 = pneg %p182
        $region30: #{tpu_custom_call.1} parent=11 // pred_check_branch
          %259 = sbr.rel (%p257) target = $region32
        $region31: #{tpu_custom_call.1} parent=11 // pred_region
          _
        $region32: #{tpu_custom_call.1} parent=11 // pred_fallthru
          _
      $region12: #{tpu_custom_call.1} parent=5 // pred_fallthru
        _
      %p260 = scmp.lt.s32.totalorder %s25, 2
      // Predicated region
      $region33: #{tpu_custom_call.1} parent=5 // pred_check
        %p261 = pneg %p260
      $region34: #{tpu_custom_call.1} parent=5 // pred_check_branch
        %263 = sbr.rel (%p261) target = $region36
      $region35: #{tpu_custom_call.1} parent=5 // pred_region
        // Predicated region
        $region37: #{tpu_custom_call.1} parent=35 // pred_check
          %p264 = pneg %p45
        $region38: #{tpu_custom_call.1} parent=35 // pred_check_branch
          %266 = sbr.rel (%p264) target = $region40
        $region39: #{tpu_custom_call.1} parent=35 // pred_region
          %s267 = sand.u32 %s35, 1
          %s268 = scalar_lea.sflag [#allocation4], %s267
          %s269 = sand.u32 %s35, 1
          %s270 = smul.addr %s269, 256
          %s271 = scalar_lea.vmem [#allocation3], %s270
          %s272 = smul.u32 16, %s25
          %274 = vsyncadd %s268, 0
          %s275 = smul.addr %s272, 2
          %s276 = smul.addr %s275, 8
          %s277 = scalar_lea.hbm %s0, %s276
          %s278 = sshll.u32 %s277, 4
          %s279 = int_to_ptr.hbm [resolvable:$true] %s278
          %s280 = sshll.u32 %s271, 4
          %s281 = int_to_ptr.vmem [resolvable:$true] %s280
          %286 = dma.hbm_to_vmem [thread:$0]  %s279, 4096, %s281, %s268, 256, 256, 16
        $region40: #{tpu_custom_call.1} parent=35 // pred_fallthru
          _
        // Predicated region
        $region41: #{tpu_custom_call.1} parent=35 // pred_check
          %p287 = pneg %p71
        $region42: #{tpu_custom_call.1} parent=35 // pred_check_branch
          %289 = sbr.rel (%p287) target = $region44
        $region43: #{tpu_custom_call.1} parent=35 // pred_region
          %s290 = sand.u32 %s25, 1
          %s291 = scalar_lea.sflag [#allocation7], %s290
          %s292 = sand.u32 %s61, 1
          %s293 = smul.addr %s292, 256
          %s294 = scalar_lea.vmem [#allocation6], %s293
          %s295 = smul.u32 16, %s25
          %297 = vsyncadd %s291, 0
          %s298 = smul.addr %s295, 2
          %s299 = smul.addr %s298, 8
          %s300 = scalar_lea.hbm %s1, %s299
          %s301 = sshll.u32 %s300, 4
          %s302 = int_to_ptr.hbm [resolvable:$true] %s301
          %s303 = sshll.u32 %s294, 4
          %s304 = int_to_ptr.vmem [resolvable:$true] %s303
          %309 = dma.hbm_to_vmem [thread:$0]  %s302, 4096, %s304, %s291, 256, 256, 16
        $region44: #{tpu_custom_call.1} parent=35 // pred_fallthru
          _
      $region36: #{tpu_custom_call.1} parent=5 // pred_fallthru
        _
      %p310 = scmp.le.s32.totalorder 1, %s25
      %p311 = scmp.lt.s32.totalorder %s25, 3
      %p312 = pnand %p310, %p311
      %p313 = pneg %p312
      // Predicated region
      $region45: #{tpu_custom_call.1} parent=5 // pred_check
        _
      $region46: #{tpu_custom_call.1} parent=5 // pred_check_branch
        %315 = sbr.rel (%p312) target = $region48
      $region47: #{tpu_custom_call.1} parent=5 // pred_region
        %s316 = ssub.s32 %s25, 1
        %s317 = sand.u32 %s38, 1
        %s318 = scalar_lea.sflag [#allocation4], %s317
        %s319 = sand.u32 %s38, 1
        %s320 = smul.addr %s319, 256
        %s321 = scalar_lea.vmem [#allocation3], %s320
        // Predicated region
        $region49: #{tpu_custom_call.1} parent=47 // pred_check
          %p322 = pneg %p51
        $region50: #{tpu_custom_call.1} parent=47 // pred_check_branch
          %324 = sbr.rel (%p322) target = $region52
        $region51: #{tpu_custom_call.1} parent=47 // pred_region
          %326 = dma.done %s318, 4096
        $region52: #{tpu_custom_call.1} parent=47 // pred_fallthru
          _
        %s327 = sand.u32 %s30, 1
        %s328 = scalar_lea.sflag [#allocation7], %s327
        %s329 = sand.u32 %s64, 1
        %s330 = smul.addr %s329, 256
        %s331 = scalar_lea.vmem [#allocation6], %s330
        // Predicated region
        $region53: #{tpu_custom_call.1} parent=47 // pred_check
          %p332 = pneg %p77
        $region54: #{tpu_custom_call.1} parent=47 // pred_check_branch
          %334 = sbr.rel (%p332) target = $region56
        $region55: #{tpu_custom_call.1} parent=47 // pred_region
          %336 = dma.done %s328, 4096
        $region56: #{tpu_custom_call.1} parent=47 // pred_fallthru
          _
        // Predicated region
        $region57: #{tpu_custom_call.1} parent=47 // pred_check
          %p337 = pneg %p98
        $region58: #{tpu_custom_call.1} parent=47 // pred_check_branch
          %339 = sbr.rel (%p337) target = $region60
        $region59: #{tpu_custom_call.1} parent=47 // pred_region
          %341 = dma.done [#allocation7], 4096
        $region60: #{tpu_custom_call.1} parent=47 // pred_fallthru
          _
        // Predicated region
        $region61: #{tpu_custom_call.1} parent=47 // pred_check
          %p342 = pneg %p119
        $region62: #{tpu_custom_call.1} parent=47 // pred_check_branch
          %344 = sbr.rel (%p342) target = $region64
        $region63: #{tpu_custom_call.1} parent=47 // pred_region
          %346 = dma.done [#allocation10], 4096
        $region64: #{tpu_custom_call.1} parent=47 // pred_fallthru
          _
        %s347 = sand.u32 %s38, 1
        %s348 = scalar_lea.sflag [#allocation4], %s347
        %s349 = sand.u32 %s38, 1
        %s350 = smul.addr %s349, 256
        %s351 = scalar_lea.vmem [#allocation3], %s350
        %p352 = pneg %p51
        %p353 = pneg %p48
        %s354 = sand.u32 %s30, 1
        %s355 = scalar_lea.sflag [#allocation7], %s354
        %s356 = sand.u32 %s64, 1
        %s357 = smul.addr %s356, 256
        %s358 = scalar_lea.vmem [#allocation6], %s357
        %p359 = pneg %p77
        %p360 = pneg %p74
        %p361 = pneg %p98
        %p362 = pneg %p95
        %p363 = pneg %p119
        %p364 = pneg %p116
        %p365 = pneg %p140
        %p366 = pneg %p137
        %p367 = pneg %p161
        %p368 = pneg %p158
        %p369 = pneg %p182
        %p370 = pneg %p179
        %p371 = pneg %p208
        %p372 = pneg %p205
        %s373 = sand.u32 %s195, 1
        %s374 = scalar_lea.sflag [#allocation5], %s373
        %s375 = sand.u32 %s195, 1
        %s376 = scalar_lea.vmem [#allocation11], %s375
        %s377 = smul.u32 16, %s30
        %s378 = smul.u32 16, %s30
        %v379 = vld [vmem:[%s321] sm:$0xff]
        %v380 = vld [vmem:[%s321 + $0x8] sm:$0xff]
        %v381 = vld [vmem:[%s321 + $0x10] sm:$0xff]
        %v382 = vld [vmem:[%s321 + $0x18] sm:$0xff]
        %v383 = vld [vmem:[%s321 + $0x20] sm:$0xff]
        %v384 = vld [vmem:[%s321 + $0x28] sm:$0xff]
        %v385 = vld [vmem:[%s321 + $0x30] sm:$0xff]
        %v386 = vld [vmem:[%s321 + $0x38] sm:$0xff]
        %v387 = vld [vmem:[%s321 + $0x40] sm:$0xff]
        %v388 = vld [vmem:[%s321 + $0x48] sm:$0xff]
        %v389 = vld [vmem:[%s321 + $0x50] sm:$0xff]
        %v390 = vld [vmem:[%s321 + $0x58] sm:$0xff]
        %v391 = vld [vmem:[%s321 + $0x60] sm:$0xff]
        %v392 = vld [vmem:[%s321 + $0x68] sm:$0xff]
        %v393 = vld [vmem:[%s321 + $0x70] sm:$0xff]
        %v394 = vld [vmem:[%s321 + $0x78] sm:$0xff]
        %v395 = vld [vmem:[%s321 + $0x80] sm:$0xff]
        %v396 = vld [vmem:[%s321 + $0x88] sm:$0xff]
        %v397 = vld [vmem:[%s321 + $0x90] sm:$0xff]
        %v398 = vld [vmem:[%s321 + $0x98] sm:$0xff]
        %v399 = vld [vmem:[%s321 + $0xa0] sm:$0xff]
        %v400 = vld [vmem:[%s321 + $0xa8] sm:$0xff]
        %v401 = vld [vmem:[%s321 + $0xb0] sm:$0xff]
        %v402 = vld [vmem:[%s321 + $0xb8] sm:$0xff]
        %v403 = vld [vmem:[%s321 + $0xc0] sm:$0xff]
        %v404 = vld [vmem:[%s321 + $0xc8] sm:$0xff]
        %v405 = vld [vmem:[%s321 + $0xd0] sm:$0xff]
        %v406 = vld [vmem:[%s321 + $0xd8] sm:$0xff]
        %v407 = vld [vmem:[%s321 + $0xe0] sm:$0xff]
        %v408 = vld [vmem:[%s321 + $0xe8] sm:$0xff]
        %v409 = vld [vmem:[%s321 + $0xf0] sm:$0xff]
        %v410 = vld [vmem:[%s321 + $0xf8] sm:$0xff]
        %v411 = vld [vmem:[%s331] sm:$0xff]
        %v412 = vld [vmem:[%s331 + $0x8] sm:$0xff]
        %v413 = vld [vmem:[%s331 + $0x10] sm:$0xff]
        %v414 = vld [vmem:[%s331 + $0x18] sm:$0xff]
        %v415 = vld [vmem:[%s331 + $0x20] sm:$0xff]
        %v416 = vld [vmem:[%s331 + $0x28] sm:$0xff]
        %v417 = vld [vmem:[%s331 + $0x30] sm:$0xff]
        %v418 = vld [vmem:[%s331 + $0x38] sm:$0xff]
        %v419 = vld [vmem:[%s331 + $0x40] sm:$0xff]
        %v420 = vld [vmem:[%s331 + $0x48] sm:$0xff]
        %v421 = vld [vmem:[%s331 + $0x50] sm:$0xff]
        %v422 = vld [vmem:[%s331 + $0x58] sm:$0xff]
        %v423 = vld [vmem:[%s331 + $0x60] sm:$0xff]
        %v424 = vld [vmem:[%s331 + $0x68] sm:$0xff]
        %v425 = vld [vmem:[%s331 + $0x70] sm:$0xff]
        %v426 = vld [vmem:[%s331 + $0x78] sm:$0xff]
        %v427 = vld [vmem:[%s331 + $0x80] sm:$0xff]
        %v428 = vld [vmem:[%s331 + $0x88] sm:$0xff]
        %v429 = vld [vmem:[%s331 + $0x90] sm:$0xff]
        %v430 = vld [vmem:[%s331 + $0x98] sm:$0xff]
        %v431 = vld [vmem:[%s331 + $0xa0] sm:$0xff]
        %v432 = vld [vmem:[%s331 + $0xa8] sm:$0xff]
        %v433 = vld [vmem:[%s331 + $0xb0] sm:$0xff]
        %v434 = vld [vmem:[%s331 + $0xb8] sm:$0xff]
        %v435 = vld [vmem:[%s331 + $0xc0] sm:$0xff]
        %v436 = vld [vmem:[%s331 + $0xc8] sm:$0xff]
        %v437 = vld [vmem:[%s331 + $0xd0] sm:$0xff]
        %v438 = vld [vmem:[%s331 + $0xd8] sm:$0xff]
        %v439 = vld [vmem:[%s331 + $0xe0] sm:$0xff]
        %v440 = vld [vmem:[%s331 + $0xe8] sm:$0xff]
        %v441 = vld [vmem:[%s331 + $0xf0] sm:$0xff]
        %v442 = vld [vmem:[%s331 + $0xf8] sm:$0xff]
        %v443 = vld [vmem:[#allocation8] sm:$0xff]
        %v444 = vld [vmem:[#allocation8 + $0x8] sm:$0xff]
        %v445 = vld [vmem:[#allocation8 + $0x10] sm:$0xff]
        %v446 = vld [vmem:[#allocation8 + $0x18] sm:$0xff]
        %v447 = vld [vmem:[#allocation8 + $0x20] sm:$0xff]
        %v448 = vld [vmem:[#allocation8 + $0x28] sm:$0xff]
        %v449 = vld [vmem:[#allocation8 + $0x30] sm:$0xff]
        %v450 = vld [vmem:[#allocation8 + $0x38] sm:$0xff]
        %v451 = vld [vmem:[#allocation8 + $0x40] sm:$0xff]
        %v452 = vld [vmem:[#allocation8 + $0x48] sm:$0xff]
        %v453 = vld [vmem:[#allocation8 + $0x50] sm:$0xff]
        %v454 = vld [vmem:[#allocation8 + $0x58] sm:$0xff]
        %v455 = vld [vmem:[#allocation8 + $0x60] sm:$0xff]
        %v456 = vld [vmem:[#allocation8 + $0x68] sm:$0xff]
        %v457 = vld [vmem:[#allocation8 + $0x70] sm:$0xff]
        %v458 = vld [vmem:[#allocation8 + $0x78] sm:$0xff]
        %v459 = vld [vmem:[#allocation8 + $0x80] sm:$0xff]
        %v460 = vld [vmem:[#allocation8 + $0x88] sm:$0xff]
        %v461 = vld [vmem:[#allocation8 + $0x90] sm:$0xff]
        %v462 = vld [vmem:[#allocation8 + $0x98] sm:$0xff]
        %v463 = vld [vmem:[#allocation8 + $0xa0] sm:$0xff]
        %v464 = vld [vmem:[#allocation8 + $0xa8] sm:$0xff]
        %v465 = vld [vmem:[#allocation8 + $0xb0] sm:$0xff]
        %v466 = vld [vmem:[#allocation8 + $0xb8] sm:$0xff]
        %v467 = vld [vmem:[#allocation8 + $0xc0] sm:$0xff]
        %v468 = vld [vmem:[#allocation8 + $0xc8] sm:$0xff]
        %v469 = vld [vmem:[#allocation8 + $0xd0] sm:$0xff]
        %v470 = vld [vmem:[#allocation8 + $0xd8] sm:$0xff]
        %v471 = vld [vmem:[#allocation8 + $0xe0] sm:$0xff]
        %v472 = vld [vmem:[#allocation8 + $0xe8] sm:$0xff]
        %v473 = vld [vmem:[#allocation8 + $0xf0] sm:$0xff]
        %v474 = vld [vmem:[#allocation8 + $0xf8] sm:$0xff]
        %v475 = vld [vmem:[#allocation9] sm:$0xff]
        %v476 = vld [vmem:[#allocation9 + $0x8] sm:$0xff]
        %v477 = vld [vmem:[#allocation9 + $0x10] sm:$0xff]
        %v478 = vld [vmem:[#allocation9 + $0x18] sm:$0xff]
        %v479 = vld [vmem:[#allocation9 + $0x20] sm:$0xff]
        %v480 = vld [vmem:[#allocation9 + $0x28] sm:$0xff]
        %v481 = vld [vmem:[#allocation9 + $0x30] sm:$0xff]
        %v482 = vld [vmem:[#allocation9 + $0x38] sm:$0xff]
        %v483 = vld [vmem:[#allocation9 + $0x40] sm:$0xff]
        %v484 = vld [vmem:[#allocation9 + $0x48] sm:$0xff]
        %v485 = vld [vmem:[#allocation9 + $0x50] sm:$0xff]
        %v486 = vld [vmem:[#allocation9 + $0x58] sm:$0xff]
        %v487 = vld [vmem:[#allocation9 + $0x60] sm:$0xff]
        %v488 = vld [vmem:[#allocation9 + $0x68] sm:$0xff]
        %v489 = vld [vmem:[#allocation9 + $0x70] sm:$0xff]
        %v490 = vld [vmem:[#allocation9 + $0x78] sm:$0xff]
        %v491 = vld [vmem:[#allocation9 + $0x80] sm:$0xff]
        %v492 = vld [vmem:[#allocation9 + $0x88] sm:$0xff]
        %v493 = vld [vmem:[#allocation9 + $0x90] sm:$0xff]
        %v494 = vld [vmem:[#allocation9 + $0x98] sm:$0xff]
        %v495 = vld [vmem:[#allocation9 + $0xa0] sm:$0xff]
        %v496 = vld [vmem:[#allocation9 + $0xa8] sm:$0xff]
        %v497 = vld [vmem:[#allocation9 + $0xb0] sm:$0xff]
        %v498 = vld [vmem:[#allocation9 + $0xb8] sm:$0xff]
        %v499 = vld [vmem:[#allocation9 + $0xc0] sm:$0xff]
        %v500 = vld [vmem:[#allocation9 + $0xc8] sm:$0xff]
        %v501 = vld [vmem:[#allocation9 + $0xd0] sm:$0xff]
        %v502 = vld [vmem:[#allocation9 + $0xd8] sm:$0xff]
        %v503 = vld [vmem:[#allocation9 + $0xe0] sm:$0xff]
        %v504 = vld [vmem:[#allocation9 + $0xe8] sm:$0xff]
        %v505 = vld [vmem:[#allocation9 + $0xf0] sm:$0xff]
        %v506 = vld [vmem:[#allocation9 + $0xf8] sm:$0xff]
        %507 = vmatpush.msra.mxu0 %v490
        %508 = vmatpush.msra.mxu0 %v489
        %509 = vmatpush.msra.mxu0 %v488
        %510 = vmatpush.msra.mxu0 %v487
        %511 = vmatpush.msra.mxu0 %v486
        %512 = vmatpush.msra.mxu0 %v485
        %513 = vmatpush.msra.mxu0 %v484
        %514 = vmatpush.msra.mxu0 %v483
        %515 = vmatpush.msra.mxu0 %v482
        %516 = vmatpush.msra.mxu0 %v481
        %517 = vmatpush.msra.mxu0 %v480
        %518 = vmatpush.msra.mxu0 %v479
        %519 = vmatpush.msra.mxu0 %v478
        %520 = vmatpush.msra.mxu0 %v477
        %521 = vmatpush.msra.mxu0 %v476
        %522 = vmatpush.msra.mxu0 %v475
        %523 = vmatmul.f32.gmra.mxu0 %v411
        %v524 = vpop.f32.mrf.mxu0
        %v525 = vadd.f32 0.0, %v524
        %526 = vmatmul.f32.gmra.mxu0 %v413
        %v527 = vpop.f32.mrf.mxu0
        %v528 = vadd.f32 0.0, %v527
        %529 = vmatmul.f32.gmra.mxu0 %v415
        %v530 = vpop.f32.mrf.mxu0
        %v531 = vadd.f32 0.0, %v530
        %532 = vmatmul.f32.gmra.mxu0 %v417
        %v533 = vpop.f32.mrf.mxu0
        %v534 = vadd.f32 0.0, %v533
        %535 = vmatmul.f32.gmra.mxu0 %v419
        %v536 = vpop.f32.mrf.mxu0
        %v537 = vadd.f32 0.0, %v536
        %538 = vmatmul.f32.gmra.mxu0 %v421
        %v539 = vpop.f32.mrf.mxu0
        %v540 = vadd.f32 0.0, %v539
        %541 = vmatmul.f32.gmra.mxu0 %v423
        %v542 = vpop.f32.mrf.mxu0
        %v543 = vadd.f32 0.0, %v542
        %544 = vmatmul.f32.gmra.mxu0 %v425
        %v545 = vpop.f32.mrf.mxu0
        %v546 = vadd.f32 0.0, %v545
        %547 = vmatmul.f32.gmra.mxu0 %v427
        %v548 = vpop.f32.mrf.mxu0
        %v549 = vadd.f32 0.0, %v548
        %550 = vmatmul.f32.gmra.mxu0 %v429
        %v551 = vpop.f32.mrf.mxu0
        %v552 = vadd.f32 0.0, %v551
        %553 = vmatmul.f32.gmra.mxu0 %v431
        %v554 = vpop.f32.mrf.mxu0
        %v555 = vadd.f32 0.0, %v554
        %556 = vmatmul.f32.gmra.mxu0 %v433
        %v557 = vpop.f32.mrf.mxu0
        %v558 = vadd.f32 0.0, %v557
        %559 = vmatmul.f32.gmra.mxu0 %v435
        %v560 = vpop.f32.mrf.mxu0
        %v561 = vadd.f32 0.0, %v560
        %562 = vmatmul.f32.gmra.mxu0 %v437
        %v563 = vpop.f32.mrf.mxu0
        %v564 = vadd.f32 0.0, %v563
        %565 = vmatmul.f32.gmra.mxu0 %v439
        %v566 = vpop.f32.mrf.mxu0
        %v567 = vadd.f32 0.0, %v566
        %568 = vmatmul.f32.gmra.mxu0 %v441
        %v569 = vpop.f32.mrf.mxu0
        %v570 = vadd.f32 0.0, %v569
        %571 = vdwg.mxu0
        %572 = vmatpush.msra.mxu0 %v506
        %573 = vmatpush.msra.mxu0 %v505
        %574 = vmatpush.msra.mxu0 %v504
        %575 = vmatpush.msra.mxu0 %v503
        %576 = vmatpush.msra.mxu0 %v502
        %577 = vmatpush.msra.mxu0 %v501
        %578 = vmatpush.msra.mxu0 %v500
        %579 = vmatpush.msra.mxu0 %v499
        %580 = vmatpush.msra.mxu0 %v498
        %581 = vmatpush.msra.mxu0 %v497
        %582 = vmatpush.msra.mxu0 %v496
        %583 = vmatpush.msra.mxu0 %v495
        %584 = vmatpush.msra.mxu0 %v494
        %585 = vmatpush.msra.mxu0 %v493
        %586 = vmatpush.msra.mxu0 %v492
        %587 = vmatpush.msra.mxu0 %v491
        %588 = vmatmul.f32.gmra.mxu0 %v412
        %v589 = vpop.f32.mrf.mxu0
        %v590 = vadd.f32 %v525, %v589
        %591 = vmatmul.f32.gmra.mxu0 %v414
        %v592 = vpop.f32.mrf.mxu0
        %v593 = vadd.f32 %v528, %v592
        %594 = vmatmul.f32.gmra.mxu0 %v416
        %v595 = vpop.f32.mrf.mxu0
        %v596 = vadd.f32 %v531, %v595
        %597 = vmatmul.f32.gmra.mxu0 %v418
        %v598 = vpop.f32.mrf.mxu0
        %v599 = vadd.f32 %v534, %v598
        %600 = vmatmul.f32.gmra.mxu0 %v420
        %v601 = vpop.f32.mrf.mxu0
        %v602 = vadd.f32 %v537, %v601
        %603 = vmatmul.f32.gmra.mxu0 %v422
        %v604 = vpop.f32.mrf.mxu0
        %v605 = vadd.f32 %v540, %v604
        %606 = vmatmul.f32.gmra.mxu0 %v424
        %v607 = vpop.f32.mrf.mxu0
        %v608 = vadd.f32 %v543, %v607
        %609 = vmatmul.f32.gmra.mxu0 %v426
        %v610 = vpop.f32.mrf.mxu0
        %v611 = vadd.f32 %v546, %v610
        %612 = vmatmul.f32.gmra.mxu0 %v428
        %v613 = vpop.f32.mrf.mxu0
        %v614 = vadd.f32 %v549, %v613
        %615 = vmatmul.f32.gmra.mxu0 %v430
        %v616 = vpop.f32.mrf.mxu0
        %v617 = vadd.f32 %v552, %v616
        %618 = vmatmul.f32.gmra.mxu0 %v432
        %v619 = vpop.f32.mrf.mxu0
        %v620 = vadd.f32 %v555, %v619
        %621 = vmatmul.f32.gmra.mxu0 %v434
        %v622 = vpop.f32.mrf.mxu0
        %v623 = vadd.f32 %v558, %v622
        %624 = vmatmul.f32.gmra.mxu0 %v436
        %v625 = vpop.f32.mrf.mxu0
        %v626 = vadd.f32 %v561, %v625
        %627 = vmatmul.f32.gmra.mxu0 %v438
        %v628 = vpop.f32.mrf.mxu0
        %v629 = vadd.f32 %v564, %v628
        %630 = vmatmul.f32.gmra.mxu0 %v440
        %v631 = vpop.f32.mrf.mxu0
        %v632 = vadd.f32 %v567, %v631
        %633 = vmatmul.f32.gmra.mxu0 %v442
        %v634 = vpop.f32.mrf.mxu0
        %v635 = vadd.f32 %v570, %v634
        %636 = vdwg.mxu0
        %637 = vmatpush.msra.mxu0 %v458
        %638 = vmatpush.msra.mxu0 %v457
        %639 = vmatpush.msra.mxu0 %v456
        %640 = vmatpush.msra.mxu0 %v455
        %641 = vmatpush.msra.mxu0 %v454
        %642 = vmatpush.msra.mxu0 %v453
        %643 = vmatpush.msra.mxu0 %v452
        %644 = vmatpush.msra.mxu0 %v451
        %645 = vmatpush.msra.mxu0 %v450
        %646 = vmatpush.msra.mxu0 %v449
        %647 = vmatpush.msra.mxu0 %v448
        %648 = vmatpush.msra.mxu0 %v447
        %649 = vmatpush.msra.mxu0 %v446
        %650 = vmatpush.msra.mxu0 %v445
        %651 = vmatpush.msra.mxu0 %v444
        %652 = vmatpush.msra.mxu0 %v443
        %653 = vmatmul.f32.gmra.mxu0 %v379
        %v654 = vpop.f32.mrf.mxu0
        %v655 = vadd.f32 %v590, %v654
        %656 = vmatmul.f32.gmra.mxu0 %v381
        %v657 = vpop.f32.mrf.mxu0
        %v658 = vadd.f32 %v593, %v657
        %659 = vmatmul.f32.gmra.mxu0 %v383
        %v660 = vpop.f32.mrf.mxu0
        %v661 = vadd.f32 %v596, %v660
        %662 = vmatmul.f32.gmra.mxu0 %v385
        %v663 = vpop.f32.mrf.mxu0
        %v664 = vadd.f32 %v599, %v663
        %665 = vmatmul.f32.gmra.mxu0 %v387
        %v666 = vpop.f32.mrf.mxu0
        %v667 = vadd.f32 %v602, %v666
        %668 = vmatmul.f32.gmra.mxu0 %v389
        %v669 = vpop.f32.mrf.mxu0
        %v670 = vadd.f32 %v605, %v669
        %671 = vmatmul.f32.gmra.mxu0 %v391
        %v672 = vpop.f32.mrf.mxu0
        %v673 = vadd.f32 %v608, %v672
        %674 = vmatmul.f32.gmra.mxu0 %v393
        %v675 = vpop.f32.mrf.mxu0
        %v676 = vadd.f32 %v611, %v675
        %677 = vmatmul.f32.gmra.mxu0 %v395
        %v678 = vpop.f32.mrf.mxu0
        %v679 = vadd.f32 %v614, %v678
        %680 = vmatmul.f32.gmra.mxu0 %v397
        %v681 = vpop.f32.mrf.mxu0
        %v682 = vadd.f32 %v617, %v681
        %683 = vmatmul.f32.gmra.mxu0 %v399
        %v684 = vpop.f32.mrf.mxu0
        %v685 = vadd.f32 %v620, %v684
        %686 = vmatmul.f32.gmra.mxu0 %v401
        %v687 = vpop.f32.mrf.mxu0
        %v688 = vadd.f32 %v623, %v687
        %689 = vmatmul.f32.gmra.mxu0 %v403
        %v690 = vpop.f32.mrf.mxu0
        %v691 = vadd.f32 %v626, %v690
        %692 = vmatmul.f32.gmra.mxu0 %v405
        %v693 = vpop.f32.mrf.mxu0
        %v694 = vadd.f32 %v629, %v693
        %695 = vmatmul.f32.gmra.mxu0 %v407
        %v696 = vpop.f32.mrf.mxu0
        %v697 = vadd.f32 %v632, %v696
        %698 = vmatmul.f32.gmra.mxu0 %v409
        %v699 = vpop.f32.mrf.mxu0
        %v700 = vadd.f32 %v635, %v699
        %701 = vdwg.mxu0
        %702 = vmatpush.msra.mxu0 %v474
        %703 = vmatpush.msra.mxu0 %v473
        %704 = vmatpush.msra.mxu0 %v472
        %705 = vmatpush.msra.mxu0 %v471
        %706 = vmatpush.msra.mxu0 %v470
        %707 = vmatpush.msra.mxu0 %v469
        %708 = vmatpush.msra.mxu0 %v468
        %709 = vmatpush.msra.mxu0 %v467
        %710 = vmatpush.msra.mxu0 %v466
        %711 = vmatpush.msra.mxu0 %v465
        %712 = vmatpush.msra.mxu0 %v464
        %713 = vmatpush.msra.mxu0 %v463
        %714 = vmatpush.msra.mxu0 %v462
        %715 = vmatpush.msra.mxu0 %v461
        %716 = vmatpush.msra.mxu0 %v460
        %717 = vmatpush.msra.mxu0 %v459
        %718 = vmatmul.f32.gmra.mxu0 %v380
        %v719 = vpop.f32.mrf.mxu0
        %v720 = vadd.f32 %v655, %v719
        %721 = vmatmul.f32.gmra.mxu0 %v382
        %v722 = vpop.f32.mrf.mxu0
        %v723 = vadd.f32 %v658, %v722
        %724 = vmatmul.f32.gmra.mxu0 %v384
        %v725 = vpop.f32.mrf.mxu0
        %v726 = vadd.f32 %v661, %v725
        %727 = vmatmul.f32.gmra.mxu0 %v386
        %v728 = vpop.f32.mrf.mxu0
        %v729 = vadd.f32 %v664, %v728
        %730 = vmatmul.f32.gmra.mxu0 %v388
        %v731 = vpop.f32.mrf.mxu0
        %v732 = vadd.f32 %v667, %v731
        %733 = vmatmul.f32.gmra.mxu0 %v390
        %v734 = vpop.f32.mrf.mxu0
        %v735 = vadd.f32 %v670, %v734
        %736 = vmatmul.f32.gmra.mxu0 %v392
        %v737 = vpop.f32.mrf.mxu0
        %v738 = vadd.f32 %v673, %v737
        %739 = vmatmul.f32.gmra.mxu0 %v394
        %v740 = vpop.f32.mrf.mxu0
        %v741 = vadd.f32 %v676, %v740
        %742 = vmatmul.f32.gmra.mxu0 %v396
        %v743 = vpop.f32.mrf.mxu0
        %v744 = vadd.f32 %v679, %v743
        %745 = vmatmul.f32.gmra.mxu0 %v398
        %v746 = vpop.f32.mrf.mxu0
        %v747 = vadd.f32 %v682, %v746
        %748 = vmatmul.f32.gmra.mxu0 %v400
        %v749 = vpop.f32.mrf.mxu0
        %v750 = vadd.f32 %v685, %v749
        %751 = vmatmul.f32.gmra.mxu0 %v402
        %v752 = vpop.f32.mrf.mxu0
        %v753 = vadd.f32 %v688, %v752
        %754 = vmatmul.f32.gmra.mxu0 %v404
        %v755 = vpop.f32.mrf.mxu0
        %v756 = vadd.f32 %v691, %v755
        %757 = vmatmul.f32.gmra.mxu0 %v406
        %v758 = vpop.f32.mrf.mxu0
        %v759 = vadd.f32 %v694, %v758
        %760 = vmatmul.f32.gmra.mxu0 %v408
        %v761 = vpop.f32.mrf.mxu0
        %v762 = vadd.f32 %v697, %v761
        %763 = vmatmul.f32.gmra.mxu0 %v410
        %v764 = vpop.f32.mrf.mxu0
        %v765 = vadd.f32 %v700, %v764
        %766 = vdwg.mxu0
        %v767 = vld [vmem:[%s4] sm:$0x1]
        %v769 = vperm.slane %v767, 0
        %v771 = vadd.f32 %v720, %v769
        %v772 = vadd.f32 %v723, %v769
        %v773 = vadd.f32 %v726, %v769
        %v774 = vadd.f32 %v729, %v769
        %v775 = vadd.f32 %v732, %v769
        %v776 = vadd.f32 %v735, %v769
        %v777 = vadd.f32 %v738, %v769
        %v778 = vadd.f32 %v741, %v769
        %v779 = vadd.f32 %v744, %v769
        %v780 = vadd.f32 %v747, %v769
        %v781 = vadd.f32 %v750, %v769
        %v782 = vadd.f32 %v753, %v769
        %v783 = vadd.f32 %v756, %v769
        %v784 = vadd.f32 %v759, %v769
        %v785 = vadd.f32 %v762, %v769
        %v786 = vadd.f32 %v765, %v769
        %v787 = vmax.f32 %v771, 0.0
        %v788 = vmax.f32 %v772, 0.0
        %v789 = vmax.f32 %v773, 0.0
        %v790 = vmax.f32 %v774, 0.0
        %v791 = vmax.f32 %v775, 0.0
        %v792 = vmax.f32 %v776, 0.0
        %v793 = vmax.f32 %v777, 0.0
        %v794 = vmax.f32 %v778, 0.0
        %v795 = vmax.f32 %v779, 0.0
        %v796 = vmax.f32 %v780, 0.0
        %v797 = vmax.f32 %v781, 0.0
        %v798 = vmax.f32 %v782, 0.0
        %v799 = vmax.f32 %v783, 0.0
        %v800 = vmax.f32 %v784, 0.0
        %v801 = vmax.f32 %v785, 0.0
        %v802 = vmax.f32 %v786, 0.0
        %v803 = vld [vmem:[%s5] sm:$0x1]
        %v804 = vld [vmem:[#allocation2] sm:$0x1]
        %806 = vset.pattern.permute.xlu0 0
        %807 = vperm.xlu0 %806, %v804
        %v808 = vpop.permute.xlu0 %807
        %v810 = vperm.slane %v808, 0
        %811 = vmatpush.xpose.msra.mxu0 %v802
        %812 = vmatpush.xpose.msra.mxu0 %v801
        %813 = vmatpush.xpose.msra.mxu0 %v800
        %814 = vmatpush.xpose.msra.mxu0 %v799
        %815 = vmatpush.xpose.msra.mxu0 %v798
        %816 = vmatpush.xpose.msra.mxu0 %v797
        %817 = vmatpush.xpose.msra.mxu0 %v796
        %818 = vmatpush.xpose.msra.mxu0 %v795
        %819 = vmatpush.xpose.msra.mxu0 %v794
        %820 = vmatpush.xpose.msra.mxu0 %v793
        %821 = vmatpush.xpose.msra.mxu0 %v792
        %822 = vmatpush.xpose.msra.mxu0 %v791
        %823 = vmatpush.xpose.msra.mxu0 %v790
        %824 = vmatpush.xpose.msra.mxu0 %v789
        %825 = vmatpush.xpose.msra.mxu0 %v788
        %826 = vmatpush.xpose.msra.mxu0 %v787
        %827 = vmatmul.f32.gmra.mxu0 %v803
        %v828 = vpop.f32.mrf.mxu0
        %v829 = vadd.f32 %v810, %v828
        %830 = vdwg.mxu0
        %v831 = vxor.u32 %v829, 2147483648
        %v832 = vmul.f32 %v831, 1.442695
        %v833 = vpow.pop %v832
        %v834 = vadd.f32 %v833, 1.0
        %v835 = vrcp.pop %v834
        %v836 = vmul.f32 %v834, %v835
        %v837 = vsub.f32 1.0, %v836
        %v838 = vmul.f32 %v835, %v837
        %v839 = vadd.f32 %v835, %v838
        %vm840 = vweird.f32 %v834
        %vm841 = vweird.f32 %v835
        %vm842 = vmor %vm840, %vm841
        %v843 = vsel %vm842, %v835, %v839
        %v844 = vand.u32 2147483647, %v834
        %vm845 = vcmp.eq.f32.partialorder %v844, 8.507059e+37
        %v846 = vand.u32 %v834, 2147483648
        %v847 = vor.u32 1.1754944e-38, %v846
        %v848 = vsel %vm845, %v847, %v843
        %v849 = vmul.f32 1.0, %v848
        %850 = vst [vmem:[%s376] sm:$0x1] %v849
        %s851 = sand.u32 %s195, 1
        %s852 = scalar_lea.sflag [#allocation5], %s851
        %s853 = sand.u32 %s195, 1
        %s854 = scalar_lea.vmem [#allocation11], %s853
        // Predicated region
        $region65: #{tpu_custom_call.1} parent=47 // pred_check
          %p855 = pneg %p205
        $region66: #{tpu_custom_call.1} parent=47 // pred_check_branch
          %857 = sbr.rel (%p855) target = $region68
        $region67: #{tpu_custom_call.1} parent=47 // pred_region
          %859 = vsyncadd %s852, 0
          %s860 = scalar_lea.hbm %s7, %s30
          %s862 = sshll.u32 %s854, 4
          %s863 = int_to_ptr.vmem [resolvable:$true] %s862
          %s864 = sshll.u32 %s860, 4
          %s865 = int_to_ptr.hbm [resolvable:$true] %s864
          %867 = dma.vmem_to_hbm [thread:$0]  %s863, 16, %s865, %s852
        $region68: #{tpu_custom_call.1} parent=47 // pred_fallthru
          _
      $region48: #{tpu_custom_call.1} parent=5 // pred_fallthru
        _
      %p868 = scmp.le.s32.totalorder 2, %s25
      // Predicated region
      $region69: #{tpu_custom_call.1} parent=5 // pred_check
        %p869 = pneg %p868
      $region70: #{tpu_custom_call.1} parent=5 // pred_check_branch
        %871 = sbr.rel (%p869) target = $region72
      $region71: #{tpu_custom_call.1} parent=5 // pred_region
        %s872 = ssub.s32 %s25, 2
        // Predicated region
        $region73: #{tpu_custom_call.1} parent=71 // pred_check
          %p873 = pneg %p211
        $region74: #{tpu_custom_call.1} parent=71 // pred_check_branch
          %875 = sbr.rel (%p873) target = $region76
        $region75: #{tpu_custom_call.1} parent=71 // pred_region
          %s876 = sand.u32 %s196, 1
          %s877 = scalar_lea.sflag [#allocation5], %s876
          %s878 = sand.u32 %s196, 1
          %s879 = scalar_lea.vmem [#allocation11], %s878
          %881 = dma.done %s877, 16
        $region76: #{tpu_custom_call.1} parent=71 // pred_fallthru
          _
      $region72: #{tpu_custom_call.1} parent=5 // pred_fallthru
        _
    $region6: #{tpu_custom_call.1} parent=1 // loop_footer
      %s29 = sadd.s32 1, %s25
    $region7: #{tpu_custom_call.1} parent=1 // loop_footer_branch
      %24 = sbr.rel target = $region3
    $region8: #{tpu_custom_call.1} parent=1 // loop_exit
      _
    %882 = vsyncpa [#allocation4], 1
    %s883 = scalar_lea.sflag [#allocation4], 1
    %884 = vsyncpa %s883, 1
    %885 = vsyncpa [#allocation7], 1
    %s886 = scalar_lea.sflag [#allocation7], 1
    %887 = vsyncpa %s886, 1
    %888 = vsyncpa [#allocation10], 1
    %889 = vsyncpa [#allocation5], 1
    %s890 = scalar_lea.sflag [#allocation5], 1
    %891 = vsyncpa %s890, 1

</llo_original>
